<compile_context>
chip_gen: v6e
topology: v6e:2x2x1
jax: 0.10.0
libtpu: 0.0.40
codegen_flags: <defaults>
</compile_context>

<pallas_src>
import jax
import jax.numpy as jnp
from jax.experimental import pallas as pl
from jax.experimental.pallas import tpu as pltpu


def _sigmoid_eup(v):
    # sigmoid(v) == 0.5 * (tanh(v / 2) + 1): single EUP transcendental,
    # avoids the exp + VALU divide that jax.nn.sigmoid lowers to.
    return 0.5 * jnp.tanh(0.5 * v) + 0.5


def mlp_kernel(x_ref, w1_ref, b1_ref, w2_ref, b2_ref, w3_ref, b3_ref, o_ref):
    # x_ref: (8, TB)  features on sublanes, batch on lanes.
    # wN_ref: (in, out), bN_ref: (1, out) -- tiny, VMEM-resident.
    # o_ref: (1, TB)  lane-dense output block.

    def layer(w_ref, b_ref, h):
        # h: (in, TB) -> (out, TB), pure VPU multiply + XLU sublane-reduce.
        w = w_ref[...]            # (in, out)
        b = b_ref[...]            # (1, out)
        out_dim = w.shape[1]
        rows = []
        for j in range(out_dim):                       # out_dim <= 6: static unroll
            wj = w[:, j:j + 1]                         # (in, 1), broadcast over lanes
            zj = jnp.sum(h * wj, axis=0, keepdims=True)  # (1, TB)
            rows.append(zj + b[:, j:j + 1])            # + scalar bias
        z = rows[0] if out_dim == 1 else jnp.concatenate(rows, axis=0)
        return _sigmoid_eup(z)

    h = x_ref[...]                 # already f32; no redundant cast
    h = layer(w1_ref, b1_ref, h)   # (6, TB)
    h = layer(w2_ref, b2_ref, h)   # (4, TB)
    h = layer(w3_ref, b3_ref, h)   # (1, TB)
    o_ref[...] = h                 # full-width unmasked store


def mlp_forward(x, params, *, block_b=65536):
    """x: (B, 8) f32 -> (B, 1) f32.  block_b: batch-lane tile per grid step."""
    w1, b1, w2, b2, w3, b3 = params
    B, F = x.shape
    assert F == 8, F

    # Batch tile: multiple of 128 lanes, large enough to amortize the
    # ~0.35us/step pipeline overhead; 8*tb*4B x 2 buffers stays far under the
    # 32 MiB scoped VMEM default on all of v5e / v6e / v7x.
    tb = min(block_b, pl.cdiv(B, 128) * 128)
    b_pad = pl.cdiv(B, tb) * tb

    # Layout plumbing in the wrapper: pad batch, put batch on the lane axis.
    x_t = jnp.pad(x, ((0, b_pad - B), (0, 0))).T      # (8, b_pad)

    grid = (b_pad // tb,)
    const_spec = lambda a: pl.BlockSpec(a.shape, lambda i: (0, 0))  # VMEM-resident params

    out_t = pl.pallas_call(
        mlp_kernel,
        out_shape=jax.ShapeDtypeStruct((1, b_pad), jnp.float32),
        grid=grid,
        in_specs=[
            pl.BlockSpec((8, tb), lambda i: (0, i)),   # x stream
            const_spec(w1), const_spec(b1),
            const_spec(w2), const_spec(b2),
            const_spec(w3), const_spec(b3),
        ],
        out_specs=pl.BlockSpec((1, tb), lambda i: (0, i)),
        compiler_params=pltpu.CompilerParams(
            dimension_semantics=("parallel",),         # shard batch across TCs (v7x)
        ),
    )(x_t, w1, b1, w2, b2, w3, b3)

    return out_t.T[:B, :]                              # back to (B, 1)


def init_params(key):
    """Deterministic init mimicking torch.nn.Linear: U(-1/sqrt(fan_in), 1/sqrt(fan_in)).

    Weights stored as (in, out) (i.e. torch weight transposed), biases as (1, out).
    """
    def linear(key, fan_in, fan_out):
        kw, kb = jax.random.split(key)
        bound = 1.0 / jnp.sqrt(float(fan_in))
        w = jax.random.uniform(kw, (fan_in, fan_out), jnp.float32, -bound, bound)
        b = jax.random.uniform(kb, (1, fan_out), jnp.float32, -bound, bound)
        return w, b

    k1, k2, k3 = jax.random.split(key, 3)
    w1, b1 = linear(k1, 8, 6)
    w2, b2 = linear(k2, 6, 4)
    w3, b3 = linear(k3, 4, 1)
    return (w1, b1, w2, b2, w3, b3)


def reference_forward(x, params):
    """Pure-JAX reference (matches the PyTorch module)."""
    w1, b1, w2, b2, w3, b3 = params
    h = jax.nn.sigmoid(x @ w1 + b1)
    h = jax.nn.sigmoid(h @ w2 + b2)
    return jax.nn.sigmoid(h @ w3 + b3)


if __name__ == "__main__":
    key = jax.random.PRNGKey(0)
    kx, kp = jax.random.split(key)
    params = init_params(kp)

    # Small-batch check (single grid step, tb = 128 after padding).
    B = 8
    x = jax.random.normal(kx, (B, 8), dtype=jnp.float32)
    out = jax.block_until_ready(mlp_forward(x, params))
    ref = reference_forward(x, params)
    assert out.shape == (B, 1), out.shape
    assert jnp.allclose(out, ref, atol=1e-5, rtol=1e-5), "mismatch vs reference (small batch)"

    # Multi-step grid check (exercises the batch pipeline + padding slice-off).
    B2 = 300
    x2 = jax.random.normal(jax.random.PRNGKey(1), (B2, 8), dtype=jnp.float32)
    out2 = jax.block_until_ready(mlp_forward(x2, params, block_b=128))
    ref2 = reference_forward(x2, params)
    assert out2.shape == (B2, 1), out2.shape
    assert jnp.allclose(out2, ref2, atol=1e-5, rtol=1e-5), "mismatch vs reference (grid > 1)"

    print("KERNEL_OK")
</pallas_src>

<mosaic_0001>
module attributes {stable_mosaic.version = 11 : i64} {
  func.func @mlp_kernel(%arg0: i32, %arg1: memref<8x128xf32, #tpu.memory_space<vmem>>, %arg2: memref<8x6xf32, #tpu.memory_space<vmem>>, %arg3: memref<1x6xf32, #tpu.memory_space<vmem>>, %arg4: memref<6x4xf32, #tpu.memory_space<vmem>>, %arg5: memref<1x4xf32, #tpu.memory_space<vmem>>, %arg6: memref<4x1xf32, #tpu.memory_space<vmem>>, %arg7: memref<1x1xf32, #tpu.memory_space<vmem>>, %arg8: memref<1x128xf32, #tpu.memory_space<vmem>>) attributes {dimension_semantics = [#tpu.dimension_semantics<parallel>], iteration_bounds = array<i64: 1>, scalar_prefetch = 0 : i64, scratch_operands = 0 : i64, tpu.core_type = #tpu.core_type<tc>, window_params = [{transform_indices = @transform_0, window_bounds = array<i64: 8, 128>}, {pipeline_mode = #tpu.pipeline_mode<synchronous>, transform_indices = @transform_1, window_bounds = array<i64: 8, 6>}, {pipeline_mode = #tpu.pipeline_mode<synchronous>, transform_indices = @transform_2, window_bounds = array<i64: 1, 6>}, {pipeline_mode = #tpu.pipeline_mode<synchronous>, transform_indices = @transform_3, window_bounds = array<i64: 6, 4>}, {pipeline_mode = #tpu.pipeline_mode<synchronous>, transform_indices = @transform_4, window_bounds = array<i64: 1, 4>}, {pipeline_mode = #tpu.pipeline_mode<synchronous>, transform_indices = @transform_5, window_bounds = array<i64: 4, 1>}, {pipeline_mode = #tpu.pipeline_mode<synchronous>, transform_indices = @transform_6, window_bounds = array<i64: 1, 1>}, {transform_indices = @transform_7, window_bounds = array<i64: 1, 128>}]} {
    %c0 = arith.constant 0 : index
    %c0_0 = arith.constant 0 : index
    %0 = vector.load %arg1[%c0, %c0_0] : memref<8x128xf32, #tpu.memory_space<vmem>>, vector<8x128xf32>
    %c0_1 = arith.constant 0 : index
    %c0_2 = arith.constant 0 : index
    %1 = vector.load %arg2[%c0_1, %c0_2] : memref<8x6xf32, #tpu.memory_space<vmem>>, vector<8x6xf32>
    %c0_3 = arith.constant 0 : index
    %c0_4 = arith.constant 0 : index
    %2 = vector.load %arg3[%c0_3, %c0_4] : memref<1x6xf32, #tpu.memory_space<vmem>>, vector<1x6xf32>
    %3 = vector.extract_strided_slice %1 {offsets = [0, 0], sizes = [8, 1], strides = [1, 1]} : vector<8x6xf32> to vector<8x1xf32>
    %4 = vector.broadcast %3 : vector<8x1xf32> to vector<8x128xf32>
    %5 = arith.mulf %0, %4 : vector<8x128xf32>
    %cst = arith.constant dense<0.000000e+00> : vector<128xf32>
    %6 = vector.multi_reduction <add>, %5, %cst [0] : vector<8x128xf32> to vector<128xf32>
    %7 = vector.shape_cast %6 : vector<128xf32> to vector<1x128xf32>
    %8 = vector.extract_strided_slice %2 {offsets = [0, 0], sizes = [1, 1], strides = [1, 1]} : vector<1x6xf32> to vector<1x1xf32>
    %9 = vector.broadcast %8 : vector<1x1xf32> to vector<1x128xf32>
    %10 = arith.addf %7, %9 : vector<1x128xf32>
    %11 = vector.extract_strided_slice %1 {offsets = [0, 1], sizes = [8, 1], strides = [1, 1]} : vector<8x6xf32> to vector<8x1xf32>
    %12 = vector.broadcast %11 : vector<8x1xf32> to vector<8x128xf32>
    %13 = arith.mulf %0, %12 : vector<8x128xf32>
    %cst_5 = arith.constant dense<0.000000e+00> : vector<128xf32>
    %14 = vector.multi_reduction <add>, %13, %cst_5 [0] : vector<8x128xf32> to vector<128xf32>
    %15 = vector.shape_cast %14 : vector<128xf32> to vector<1x128xf32>
    %16 = vector.extract_strided_slice %2 {offsets = [0, 1], sizes = [1, 1], strides = [1, 1]} : vector<1x6xf32> to vector<1x1xf32>
    %17 = vector.broadcast %16 : vector<1x1xf32> to vector<1x128xf32>
    %18 = arith.addf %15, %17 : vector<1x128xf32>
    %19 = vector.extract_strided_slice %1 {offsets = [0, 2], sizes = [8, 1], strides = [1, 1]} : vector<8x6xf32> to vector<8x1xf32>
    %20 = vector.broadcast %19 : vector<8x1xf32> to vector<8x128xf32>
    %21 = arith.mulf %0, %20 : vector<8x128xf32>
    %cst_6 = arith.constant dense<0.000000e+00> : vector<128xf32>
    %22 = vector.multi_reduction <add>, %21, %cst_6 [0] : vector<8x128xf32> to vector<128xf32>
    %23 = vector.shape_cast %22 : vector<128xf32> to vector<1x128xf32>
    %24 = vector.extract_strided_slice %2 {offsets = [0, 2], sizes = [1, 1], strides = [1, 1]} : vector<1x6xf32> to vector<1x1xf32>
    %25 = vector.broadcast %24 : vector<1x1xf32> to vector<1x128xf32>
    %26 = arith.addf %23, %25 : vector<1x128xf32>
    %27 = vector.extract_strided_slice %1 {offsets = [0, 3], sizes = [8, 1], strides = [1, 1]} : vector<8x6xf32> to vector<8x1xf32>
    %28 = vector.broadcast %27 : vector<8x1xf32> to vector<8x128xf32>
    %29 = arith.mulf %0, %28 : vector<8x128xf32>
    %cst_7 = arith.constant dense<0.000000e+00> : vector<128xf32>
    %30 = vector.multi_reduction <add>, %29, %cst_7 [0] : vector<8x128xf32> to vector<128xf32>
    %31 = vector.shape_cast %30 : vector<128xf32> to vector<1x128xf32>
    %32 = vector.extract_strided_slice %2 {offsets = [0, 3], sizes = [1, 1], strides = [1, 1]} : vector<1x6xf32> to vector<1x1xf32>
    %33 = vector.broadcast %32 : vector<1x1xf32> to vector<1x128xf32>
    %34 = arith.addf %31, %33 : vector<1x128xf32>
    %35 = vector.extract_strided_slice %1 {offsets = [0, 4], sizes = [8, 1], strides = [1, 1]} : vector<8x6xf32> to vector<8x1xf32>
    %36 = vector.broadcast %35 : vector<8x1xf32> to vector<8x128xf32>
    %37 = arith.mulf %0, %36 : vector<8x128xf32>
    %cst_8 = arith.constant dense<0.000000e+00> : vector<128xf32>
    %38 = vector.multi_reduction <add>, %37, %cst_8 [0] : vector<8x128xf32> to vector<128xf32>
    %39 = vector.shape_cast %38 : vector<128xf32> to vector<1x128xf32>
    %40 = vector.extract_strided_slice %2 {offsets = [0, 4], sizes = [1, 1], strides = [1, 1]} : vector<1x6xf32> to vector<1x1xf32>
    %41 = vector.broadcast %40 : vector<1x1xf32> to vector<1x128xf32>
    %42 = arith.addf %39, %41 : vector<1x128xf32>
    %43 = vector.extract_strided_slice %1 {offsets = [0, 5], sizes = [8, 1], strides = [1, 1]} : vector<8x6xf32> to vector<8x1xf32>
    %44 = vector.broadcast %43 : vector<8x1xf32> to vector<8x128xf32>
    %45 = arith.mulf %0, %44 : vector<8x128xf32>
    %cst_9 = arith.constant dense<0.000000e+00> : vector<128xf32>
    %46 = vector.multi_reduction <add>, %45, %cst_9 [0] : vector<8x128xf32> to vector<128xf32>
    %47 = vector.shape_cast %46 : vector<128xf32> to vector<1x128xf32>
    %48 = vector.extract_strided_slice %2 {offsets = [0, 5], sizes = [1, 1], strides = [1, 1]} : vector<1x6xf32> to vector<1x1xf32>
    %49 = vector.broadcast %48 : vector<1x1xf32> to vector<1x128xf32>
    %50 = arith.addf %47, %49 : vector<1x128xf32>
    %51 = tpu.concatenate %10, %18, %26, %34, %42, %50 in 0 : vector<1x128xf32>, vector<1x128xf32>, vector<1x128xf32>, vector<1x128xf32>, vector<1x128xf32>, vector<1x128xf32> -> vector<6x128xf32>
    %cst_10 = arith.constant 5.000000e-01 : f32
    %52 = vector.broadcast %cst_10 : f32 to vector<6x128xf32>
    %53 = arith.mulf %52, %51 : vector<6x128xf32>
    %54 = math.tanh %53 : vector<6x128xf32>
    %cst_11 = arith.constant 5.000000e-01 : f32
    %55 = vector.broadcast %cst_11 : f32 to vector<6x128xf32>
    %56 = arith.mulf %55, %54 : vector<6x128xf32>
    %cst_12 = arith.constant 5.000000e-01 : f32
    %57 = vector.broadcast %cst_12 : f32 to vector<6x128xf32>
    %58 = arith.addf %56, %57 : vector<6x128xf32>
    %c0_13 = arith.constant 0 : index
    %c0_14 = arith.constant 0 : index
    %59 = vector.load %arg4[%c0_13, %c0_14] : memref<6x4xf32, #tpu.memory_space<vmem>>, vector<6x4xf32>
    %c0_15 = arith.constant 0 : index
    %c0_16 = arith.constant 0 : index
    %60 = vector.load %arg5[%c0_15, %c0_16] : memref<1x4xf32, #tpu.memory_space<vmem>>, vector<1x4xf32>
    %61 = vector.extract_strided_slice %59 {offsets = [0, 0], sizes = [6, 1], strides = [1, 1]} : vector<6x4xf32> to vector<6x1xf32>
    %62 = vector.broadcast %61 : vector<6x1xf32> to vector<6x128xf32>
    %63 = arith.mulf %58, %62 : vector<6x128xf32>
    %cst_17 = arith.constant dense<0.000000e+00> : vector<128xf32>
    %64 = vector.multi_reduction <add>, %63, %cst_17 [0] : vector<6x128xf32> to vector<128xf32>
    %65 = vector.shape_cast %64 : vector<128xf32> to vector<1x128xf32>
    %66 = vector.extract_strided_slice %60 {offsets = [0, 0], sizes = [1, 1], strides = [1, 1]} : vector<1x4xf32> to vector<1x1xf32>
    %67 = vector.broadcast %66 : vector<1x1xf32> to vector<1x128xf32>
    %68 = arith.addf %65, %67 : vector<1x128xf32>
    %69 = vector.extract_strided_slice %59 {offsets = [0, 1], sizes = [6, 1], strides = [1, 1]} : vector<6x4xf32> to vector<6x1xf32>
    %70 = vector.broadcast %69 : vector<6x1xf32> to vector<6x128xf32>
    %71 = arith.mulf %58, %70 : vector<6x128xf32>
    %cst_18 = arith.constant dense<0.000000e+00> : vector<128xf32>
    %72 = vector.multi_reduction <add>, %71, %cst_18 [0] : vector<6x128xf32> to vector<128xf32>
    %73 = vector.shape_cast %72 : vector<128xf32> to vector<1x128xf32>
    %74 = vector.extract_strided_slice %60 {offsets = [0, 1], sizes = [1, 1], strides = [1, 1]} : vector<1x4xf32> to vector<1x1xf32>
    %75 = vector.broadcast %74 : vector<1x1xf32> to vector<1x128xf32>
    %76 = arith.addf %73, %75 : vector<1x128xf32>
    %77 = vector.extract_strided_slice %59 {offsets = [0, 2], sizes = [6, 1], strides = [1, 1]} : vector<6x4xf32> to vector<6x1xf32>
    %78 = vector.broadcast %77 : vector<6x1xf32> to vector<6x128xf32>
    %79 = arith.mulf %58, %78 : vector<6x128xf32>
    %cst_19 = arith.constant dense<0.000000e+00> : vector<128xf32>
    %80 = vector.multi_reduction <add>, %79, %cst_19 [0] : vector<6x128xf32> to vector<128xf32>
    %81 = vector.shape_cast %80 : vector<128xf32> to vector<1x128xf32>
    %82 = vector.extract_strided_slice %60 {offsets = [0, 2], sizes = [1, 1], strides = [1, 1]} : vector<1x4xf32> to vector<1x1xf32>
    %83 = vector.broadcast %82 : vector<1x1xf32> to vector<1x128xf32>
    %84 = arith.addf %81, %83 : vector<1x128xf32>
    %85 = vector.extract_strided_slice %59 {offsets = [0, 3], sizes = [6, 1], strides = [1, 1]} : vector<6x4xf32> to vector<6x1xf32>
    %86 = vector.broadcast %85 : vector<6x1xf32> to vector<6x128xf32>
    %87 = arith.mulf %58, %86 : vector<6x128xf32>
    %cst_20 = arith.constant dense<0.000000e+00> : vector<128xf32>
    %88 = vector.multi_reduction <add>, %87, %cst_20 [0] : vector<6x128xf32> to vector<128xf32>
    %89 = vector.shape_cast %88 : vector<128xf32> to vector<1x128xf32>
    %90 = vector.extract_strided_slice %60 {offsets = [0, 3], sizes = [1, 1], strides = [1, 1]} : vector<1x4xf32> to vector<1x1xf32>
    %91 = vector.broadcast %90 : vector<1x1xf32> to vector<1x128xf32>
    %92 = arith.addf %89, %91 : vector<1x128xf32>
    %93 = tpu.concatenate %68, %76, %84, %92 in 0 : vector<1x128xf32>, vector<1x128xf32>, vector<1x128xf32>, vector<1x128xf32> -> vector<4x128xf32>
    %cst_21 = arith.constant 5.000000e-01 : f32
    %94 = vector.broadcast %cst_21 : f32 to vector<4x128xf32>
    %95 = arith.mulf %94, %93 : vector<4x128xf32>
    %96 = math.tanh %95 : vector<4x128xf32>
    %cst_22 = arith.constant 5.000000e-01 : f32
    %97 = vector.broadcast %cst_22 : f32 to vector<4x128xf32>
    %98 = arith.mulf %97, %96 : vector<4x128xf32>
    %cst_23 = arith.constant 5.000000e-01 : f32
    %99 = vector.broadcast %cst_23 : f32 to vector<4x128xf32>
    %100 = arith.addf %98, %99 : vector<4x128xf32>
    %c0_24 = arith.constant 0 : index
    %c0_25 = arith.constant 0 : index
    %101 = vector.load %arg6[%c0_24, %c0_25] : memref<4x1xf32, #tpu.memory_space<vmem>>, vector<4x1xf32>
    %c0_26 = arith.constant 0 : index
    %c0_27 = arith.constant 0 : index
    %102 = vector.load %arg7[%c0_26, %c0_27] : memref<1x1xf32, #tpu.memory_space<vmem>>, vector<1x1xf32>
    %103 = vector.broadcast %101 : vector<4x1xf32> to vector<4x128xf32>
    %104 = arith.mulf %100, %103 : vector<4x128xf32>
    %cst_28 = arith.constant dense<0.000000e+00> : vector<128xf32>
    %105 = vector.multi_reduction <add>, %104, %cst_28 [0] : vector<4x128xf32> to vector<128xf32>
    %106 = vector.shape_cast %105 : vector<128xf32> to vector<1x128xf32>
    %107 = vector.broadcast %102 : vector<1x1xf32> to vector<1x128xf32>
    %108 = arith.addf %106, %107 : vector<1x128xf32>
    %cst_29 = arith.constant 5.000000e-01 : f32
    %109 = vector.broadcast %cst_29 : f32 to vector<1x128xf32>
    %110 = arith.mulf %109, %108 : vector<1x128xf32>
    %111 = math.tanh %110 : vector<1x128xf32>
    %cst_30 = arith.constant 5.000000e-01 : f32
    %112 = vector.broadcast %cst_30 : f32 to vector<1x128xf32>
    %113 = arith.mulf %112, %111 : vector<1x128xf32>
    %cst_31 = arith.constant 5.000000e-01 : f32
    %114 = vector.broadcast %cst_31 : f32 to vector<1x128xf32>
    %115 = arith.addf %113, %114 : vector<1x128xf32>
    %c0_32 = arith.constant 0 : index
    %c0_33 = arith.constant 0 : index
    %116 = vector.load %arg8[%c0_32, %c0_33] : memref<1x128xf32, #tpu.memory_space<vmem>>, vector<1x128xf32>
    tpu.vector_store %arg8[%c0_32, %c0_33], %115 {strides = array<i32>} : memref<1x128xf32, #tpu.memory_space<vmem>>, vector<1x128xf32>,
    return
  }
  func.func @transform_0(%arg0: i32) -> (i32, i32) {
    %c0_i32 = arith.constant 0 : i32
    %c0_i32_0 = arith.constant 0 : i32
    return %c0_i32, %arg0 : i32, i32
  }
  func.func @transform_1(%arg0: i32) -> (i32, i32) {
    %c0_i32 = arith.constant 0 : i32
    %c0_i32_0 = arith.constant 0 : i32
    %c0_i32_1 = arith.constant 0 : i32
    return %c0_i32, %c0_i32_0 : i32, i32
  }
  func.func @transform_2(%arg0: i32) -> (i32, i32) {
    %c0_i32 = arith.constant 0 : i32
    %c0_i32_0 = arith.constant 0 : i32
    %c0_i32_1 = arith.constant 0 : i32
    return %c0_i32, %c0_i32_0 : i32, i32
  }
  func.func @transform_3(%arg0: i32) -> (i32, i32) {
    %c0_i32 = arith.constant 0 : i32
    %c0_i32_0 = arith.constant 0 : i32
    %c0_i32_1 = arith.constant 0 : i32
    return %c0_i32, %c0_i32_0 : i32, i32
  }
  func.func @transform_4(%arg0: i32) -> (i32, i32) {
    %c0_i32 = arith.constant 0 : i32
    %c0_i32_0 = arith.constant 0 : i32
    %c0_i32_1 = arith.constant 0 : i32
    return %c0_i32, %c0_i32_0 : i32, i32
  }
  func.func @transform_5(%arg0: i32) -> (i32, i32) {
    %c0_i32 = arith.constant 0 : i32
    %c0_i32_0 = arith.constant 0 : i32
    %c0_i32_1 = arith.constant 0 : i32
    return %c0_i32, %c0_i32_0 : i32, i32
  }
  func.func @transform_6(%arg0: i32) -> (i32, i32) {
    %c0_i32 = arith.constant 0 : i32
    %c0_i32_0 = arith.constant 0 : i32
    %c0_i32_1 = arith.constant 0 : i32
    return %c0_i32, %c0_i32_0 : i32, i32
  }
  func.func @transform_7(%arg0: i32) -> (i32, i32) {
    %c0_i32 = arith.constant 0 : i32
    %c0_i32_0 = arith.constant 0 : i32
    return %c0_i32, %arg0 : i32, i32
  }
}

</mosaic_0001>

<llo_original>
// kernel: tpu_custom_call.1
$region0: #{tpu_custom_call.1}
  #allocation0 [shape = 'u32[]', space=smem, size = 0x4, offset = 0x4, fixed_abs, tag = 'smem constant byte address 0x4 - core index']
  #allocation1 [shape = 'u32[144,128]{1,0:T(1,128)}', space=vmem, size = 0x12000, scoped, tag = 'internal scratch']
  #allocation2 [shape = 'f32[1,1]{1,0:T(1,128)S(1)}', space=vmem, size = 0x200, scoped, tag = 'scoped memory for tpu_custom_call.1']
  %s0 = inlined_call_operand.vmem [shape: f32[8,128], index: 0, kind: input, shape index: {}]
  %s1 = inlined_call_operand.vmem [shape: f32[8,6], index: 1, kind: input, shape index: {}]
  %s2 = inlined_call_operand.vmem [shape: f32[1,6], index: 2, kind: input, shape index: {}]
  %s3 = inlined_call_operand.vmem [shape: f32[6,4], index: 3, kind: input, shape index: {}]
  %s4 = inlined_call_operand.vmem [shape: f32[1,4], index: 4, kind: input, shape index: {}]
  %s5 = inlined_call_operand.vmem [shape: f32[4,1], index: 5, kind: input, shape index: {}]
  %s6 = inlined_call_operand.<no memory space> [shape: f32[1,1], index: 6, kind: input, shape index: {}]
  %s7 = inlined_call_operand.hbm [shape: f32[1,128], index: 7, kind: output, shape index: {}]
  %s8 = sld [smem:[#allocation0]]
  $region38: #{tpu_custom_call.1} parent=0
    _
  %s10 = ssub.s32 1, %s8
  %s11 = scalar_select 0, %s10, %s8
  %v12 = vstv %s6
  %13 = vst [vmem:[#allocation2] sm:$0x1] %v12
  $region1: #{tpu_custom_call.1} parent=0
    #allocation3 [shape = 'u8[512]{0}', space=vmem, size = 0x400, scoped, tag = 'output window, operand 0, single buffered']
    #allocation4 [shape = 's32[1]{0}', space=sflag, size = 0x4, scoped, tag = 'scoped memory for tpu_custom_call.1']
    %14 = vsyncpa [#allocation4], 0
    // Predicated region
    $region2: #{tpu_custom_call.1} parent=1 // pred_check
      _
    $region3: #{tpu_custom_call.1} parent=1 // pred_check_branch
      %16 = sbr.rel (0) target = $region5
    $region4: #{tpu_custom_call.1} parent=1 // pred_region
      _
    $region5: #{tpu_custom_call.1} parent=1 // pred_fallthru
      _
    // Predicated region
    $region6: #{tpu_custom_call.1} parent=1 // pred_check
      _
    $region7: #{tpu_custom_call.1} parent=1 // pred_check_branch
      %18 = sbr.rel (0) target = $region9
    $region8: #{tpu_custom_call.1} parent=1 // pred_region
      _
    $region9: #{tpu_custom_call.1} parent=1 // pred_fallthru
      _
    // Predicated region
    $region10: #{tpu_custom_call.1} parent=1 // pred_check
      _
    $region11: #{tpu_custom_call.1} parent=1 // pred_check_branch
      %20 = sbr.rel (0) target = $region13
    $region12: #{tpu_custom_call.1} parent=1 // pred_region
      _
    $region13: #{tpu_custom_call.1} parent=1 // pred_fallthru
      _
    // Predicated region
    $region14: #{tpu_custom_call.1} parent=1 // pred_check
      _
    $region15: #{tpu_custom_call.1} parent=1 // pred_check_branch
      %22 = sbr.rel (0) target = $region17
    $region16: #{tpu_custom_call.1} parent=1 // pred_region
      _
    $region17: #{tpu_custom_call.1} parent=1 // pred_fallthru
      _
    // Predicated region
    $region18: #{tpu_custom_call.1} parent=1 // pred_check
      _
    $region19: #{tpu_custom_call.1} parent=1 // pred_check_branch
      %24 = sbr.rel (0) target = $region21
    $region20: #{tpu_custom_call.1} parent=1 // pred_region
      _
    $region21: #{tpu_custom_call.1} parent=1 // pred_fallthru
      _
    // Predicated region
    $region22: #{tpu_custom_call.1} parent=1 // pred_check
      _
    $region23: #{tpu_custom_call.1} parent=1 // pred_check_branch
      %26 = sbr.rel (0) target = $region25
    $region24: #{tpu_custom_call.1} parent=1 // pred_region
      _
    $region25: #{tpu_custom_call.1} parent=1 // pred_fallthru
      _
    // Predicated region
    $region26: #{tpu_custom_call.1} parent=1 // pred_check
      _
    $region27: #{tpu_custom_call.1} parent=1 // pred_check_branch
      %28 = sbr.rel (0) target = $region29
    $region28: #{tpu_custom_call.1} parent=1 // pred_region
      _
    $region29: #{tpu_custom_call.1} parent=1 // pred_fallthru
      _
    %v29 = vld [vmem:[%s0] sm:$0xff]
    %v30 = vld [vmem:[%s1] sm:$0xff]
    %v31 = vld [vmem:[%s2] sm:$0x1]
    %33 = vset.pattern.permute.xlu0 0
    %34 = vperm.xlu0 %33, %v30
    %v35 = vpop.permute.xlu0 %34
    %v37 = vmul.f32 %v29, %v35
    %v38 = vrot.slane %v37, 4
    %v39 = vadd.f32 %v37, %v38
    %v40 = vrot.slane %v39, 2
    %v41 = vadd.f32 %v39, %v40
    %v42 = vrot.slane %v41, 1
    %v43 = vadd.f32 %v41, %v42
    %45 = vset.pattern.permute.xlu0 0
    %46 = vperm.xlu0 %45, %v31
    %v47 = vpop.permute.xlu0 %46
    %v49 = vlaneseq
    %v50 = vshrl.u32 %v49, 7
    %v51 = vsub.s32 0, %v50
    %v52 = vrot.slane %v47, %v51
    %v53 = vadd.f32 %v43, %v52
    %54 = vset.pattern.permute.xlu0 1
    %55 = vperm.xlu0 %54, %v30
    %v56 = vpop.permute.xlu0 %55
    %v58 = vmul.f32 %v29, %v56
    %v59 = vrot.slane %v58, 4
    %v60 = vadd.f32 %v58, %v59
    %v61 = vrot.slane %v60, 2
    %v62 = vadd.f32 %v60, %v61
    %v63 = vrot.slane %v62, 1
    %v64 = vadd.f32 %v62, %v63
    %65 = vset.pattern.permute.xlu0 1
    %66 = vperm.xlu0 %65, %v31
    %v67 = vpop.permute.xlu0 %66
    %v69 = vlaneseq
    %v70 = vshrl.u32 %v69, 7
    %v71 = vsub.s32 0, %v70
    %v72 = vrot.slane %v67, %v71
    %v73 = vadd.f32 %v64, %v72
    %74 = vset.pattern.permute.xlu0 2
    %75 = vperm.xlu0 %74, %v30
    %v76 = vpop.permute.xlu0 %75
    %v78 = vmul.f32 %v29, %v76
    %v79 = vrot.slane %v78, 4
    %v80 = vadd.f32 %v78, %v79
    %v81 = vrot.slane %v80, 2
    %v82 = vadd.f32 %v80, %v81
    %v83 = vrot.slane %v82, 1
    %v84 = vadd.f32 %v82, %v83
    %85 = vset.pattern.permute.xlu0 2
    %86 = vperm.xlu0 %85, %v31
    %v87 = vpop.permute.xlu0 %86
    %v89 = vlaneseq
    %v90 = vshrl.u32 %v89, 7
    %v91 = vsub.s32 0, %v90
    %v92 = vrot.slane %v87, %v91
    %v93 = vadd.f32 %v84, %v92
    %94 = vset.pattern.permute.xlu0 3
    %95 = vperm.xlu0 %94, %v30
    %v96 = vpop.permute.xlu0 %95
    %v98 = vmul.f32 %v29, %v96
    %v99 = vrot.slane %v98, 4
    %v100 = vadd.f32 %v98, %v99
    %v101 = vrot.slane %v100, 2
    %v102 = vadd.f32 %v100, %v101
    %v103 = vrot.slane %v102, 1
    %v104 = vadd.f32 %v102, %v103
    %105 = vset.pattern.permute.xlu0 3
    %106 = vperm.xlu0 %105, %v31
    %v107 = vpop.permute.xlu0 %106
    %v109 = vlaneseq
    %v110 = vshrl.u32 %v109, 7
    %v111 = vsub.s32 0, %v110
    %v112 = vrot.slane %v107, %v111
    %v113 = vadd.f32 %v104, %v112
    %114 = vset.pattern.permute.xlu0 4
    %115 = vperm.xlu0 %114, %v30
    %v116 = vpop.permute.xlu0 %115
    %v118 = vmul.f32 %v29, %v116
    %v119 = vrot.slane %v118, 4
    %v120 = vadd.f32 %v118, %v119
    %v121 = vrot.slane %v120, 2
    %v122 = vadd.f32 %v120, %v121
    %v123 = vrot.slane %v122, 1
    %v124 = vadd.f32 %v122, %v123
    %125 = vset.pattern.permute.xlu0 4
    %126 = vperm.xlu0 %125, %v31
    %v127 = vpop.permute.xlu0 %126
    %v129 = vlaneseq
    %v130 = vshrl.u32 %v129, 7
    %v131 = vsub.s32 0, %v130
    %v132 = vrot.slane %v127, %v131
    %v133 = vadd.f32 %v124, %v132
    %134 = vset.pattern.permute.xlu0 5
    %135 = vperm.xlu0 %134, %v30
    %v136 = vpop.permute.xlu0 %135
    %v138 = vmul.f32 %v29, %v136
    %v139 = vrot.slane %v138, 4
    %v140 = vadd.f32 %v138, %v139
    %v141 = vrot.slane %v140, 2
    %v142 = vadd.f32 %v140, %v141
    %v143 = vrot.slane %v142, 1
    %v144 = vadd.f32 %v142, %v143
    %145 = vset.pattern.permute.xlu0 5
    %146 = vperm.xlu0 %145, %v31
    %v147 = vpop.permute.xlu0 %146
    %v149 = vlaneseq
    %v150 = vshrl.u32 %v149, 7
    %v151 = vsub.s32 0, %v150
    %v152 = vrot.slane %v147, %v151
    %v153 = vadd.f32 %v144, %v152
    %vm154 = vcmask 1040384
    %v155 = vsel %vm154, %v53, %v73
    %vm156 = vcmask 1041408
    %v157 = vsel %vm156, %v155, %v93
    %vm158 = vcmask 1042432
    %v159 = vsel %vm158, %v157, %v113
    %vm160 = vcmask 1043456
    %v161 = vsel %vm160, %v159, %v133
    %vm162 = vcmask 1044480
    %v163 = vsel %vm162, %v161, %v153
    %v164 = vmul.f32 %v163, 0.5
    %v165 = vtanh.pop %v164
    %v166 = vmul.f32 %v165, 0.5
    %v167 = vadd.f32 %v166, 0.5
    %v168 = vld [vmem:[%s3] sm:$0x3f]
    %v169 = vld [vmem:[%s4] sm:$0x1]
    %171 = vset.pattern.permute.xlu0 0
    %172 = vperm.xlu0 %171, %v168
    %v173 = vpop.permute.xlu0 %172
    %v175 = vmul.f32 %v167, %v173
    %vm176 = vcmask 1045504
    %v177 = vsel %vm176, %v175, 0.0
    %v178 = vrot.slane %v177, 4
    %v179 = vadd.f32 %v177, %v178
    %v180 = vrot.slane %v179, 2
    %v181 = vadd.f32 %v179, %v180
    %v182 = vrot.slane %v181, 1
    %v183 = vadd.f32 %v181, %v182
    %185 = vset.pattern.permute.xlu0 0
    %186 = vperm.xlu0 %185, %v169
    %v187 = vpop.permute.xlu0 %186
    %v189 = vlaneseq
    %v190 = vshrl.u32 %v189, 7
    %v191 = vsub.s32 0, %v190
    %v192 = vrot.slane %v187, %v191
    %v193 = vadd.f32 %v183, %v192
    %194 = vset.pattern.permute.xlu0 1
    %195 = vperm.xlu0 %194, %v168
    %v196 = vpop.permute.xlu0 %195
    %v198 = vmul.f32 %v167, %v196
    %v199 = vsel %vm176, %v198, 0.0
    %v200 = vrot.slane %v199, 4
    %v201 = vadd.f32 %v199, %v200
    %v202 = vrot.slane %v201, 2
    %v203 = vadd.f32 %v201, %v202
    %v204 = vrot.slane %v203, 1
    %v205 = vadd.f32 %v203, %v204
    %206 = vset.pattern.permute.xlu0 1
    %207 = vperm.xlu0 %206, %v169
    %v208 = vpop.permute.xlu0 %207
    %v210 = vlaneseq
    %v211 = vshrl.u32 %v210, 7
    %v212 = vsub.s32 0, %v211
    %v213 = vrot.slane %v208, %v212
    %v214 = vadd.f32 %v205, %v213
    %215 = vset.pattern.permute.xlu0 2
    %216 = vperm.xlu0 %215, %v168
    %v217 = vpop.permute.xlu0 %216
    %v219 = vmul.f32 %v167, %v217
    %v220 = vsel %vm176, %v219, 0.0
    %v221 = vrot.slane %v220, 4
    %v222 = vadd.f32 %v220, %v221
    %v223 = vrot.slane %v222, 2
    %v224 = vadd.f32 %v222, %v223
    %v225 = vrot.slane %v224, 1
    %v226 = vadd.f32 %v224, %v225
    %227 = vset.pattern.permute.xlu0 2
    %228 = vperm.xlu0 %227, %v169
    %v229 = vpop.permute.xlu0 %228
    %v231 = vlaneseq
    %v232 = vshrl.u32 %v231, 7
    %v233 = vsub.s32 0, %v232
    %v234 = vrot.slane %v229, %v233
    %v235 = vadd.f32 %v226, %v234
    %236 = vset.pattern.permute.xlu0 3
    %237 = vperm.xlu0 %236, %v168
    %v238 = vpop.permute.xlu0 %237
    %v240 = vmul.f32 %v167, %v238
    %v241 = vsel %vm176, %v240, 0.0
    %v242 = vrot.slane %v241, 4
    %v243 = vadd.f32 %v241, %v242
    %v244 = vrot.slane %v243, 2
    %v245 = vadd.f32 %v243, %v244
    %v246 = vrot.slane %v245, 1
    %v247 = vadd.f32 %v245, %v246
    %248 = vset.pattern.permute.xlu0 3
    %249 = vperm.xlu0 %248, %v169
    %v250 = vpop.permute.xlu0 %249
    %v252 = vlaneseq
    %v253 = vshrl.u32 %v252, 7
    %v254 = vsub.s32 0, %v253
    %v255 = vrot.slane %v250, %v254
    %v256 = vadd.f32 %v247, %v255
    %v257 = vsel %vm154, %v193, %v214
    %v258 = vsel %vm156, %v257, %v235
    %v259 = vsel %vm158, %v258, %v256
    %v260 = vmul.f32 %v259, 0.5
    %v261 = vtanh.pop %v260
    %v262 = vmul.f32 %v261, 0.5
    %v263 = vadd.f32 %v262, 0.5
    %v264 = vld [vmem:[%s5] sm:$0xf]
    %v265 = vld [vmem:[#allocation2] sm:$0x1]
    %267 = vset.pattern.permute.xlu0 0
    %268 = vperm.xlu0 %267, %v264
    %v269 = vpop.permute.xlu0 %268
    %v271 = vmul.f32 %v263, %v269
    %v272 = vsel %vm160, %v271, 0.0
    %v273 = vrot.slane %v272, 4
    %v274 = vadd.f32 %v272, %v273
    %v275 = vrot.slane %v274, 2
    %v276 = vadd.f32 %v274, %v275
    %v277 = vrot.slane %v276, 1
    %v278 = vadd.f32 %v276, %v277
    %280 = vset.pattern.permute.xlu0 0
    %281 = vperm.xlu0 %280, %v265
    %v282 = vpop.permute.xlu0 %281
    %v284 = vlaneseq
    %v285 = vshrl.u32 %v284, 7
    %v286 = vsub.s32 0, %v285
    %v287 = vrot.slane %v282, %v286
    %v288 = vadd.f32 %v278, %v287
    %v289 = vmul.f32 %v288, 0.5
    %v290 = vtanh.pop %v289
    %v291 = vmul.f32 %v290, 0.5
    %v292 = vadd.f32 %v291, 0.5
    %293 = vst [vmem:[#allocation3] sm:$0x1] %v292
    // Predicated region
    $region30: #{tpu_custom_call.1} parent=1 // pred_check
      _
    $region31: #{tpu_custom_call.1} parent=1 // pred_check_branch
      %295 = sbr.rel (0) target = $region33
    $region32: #{tpu_custom_call.1} parent=1 // pred_region
      %s297 = ssub.s32 16, 16
      %298 = vsyncadd [#allocation4], %s297
      %s300 = sshll.u32 [#allocation3], 4
      %s301 = int_to_ptr.vmem [resolvable:$true] %s300
      %303 = dma.vmem_to_hbm [thread:$0]  %s301, 16, %s7, [#allocation4]
    $region33: #{tpu_custom_call.1} parent=1 // pred_fallthru
      _
    // Predicated region
    $region34: #{tpu_custom_call.1} parent=1 // pred_check
      _
    $region35: #{tpu_custom_call.1} parent=1 // pred_check_branch
      %305 = sbr.rel (0) target = $region37
    $region36: #{tpu_custom_call.1} parent=1 // pred_region
      %306 = dma.done [#allocation4], 16
    $region37: #{tpu_custom_call.1} parent=1 // pred_fallthru
      _
    %307 = vsyncpa [#allocation4], 1

</llo_original>
